<compile_context>
chip_gen: v5e
topology: v5e:2x2
jax: 0.10.0
libtpu: 0.0.40
codegen_flags: <defaults>
</compile_context>

<pallas_src>
import jax
import jax.numpy as jnp
from jax.experimental import pallas as pl
from jax.experimental.pallas import tpu as pltpu

IN_FEATURES = 10
HIDDEN = 10
OUT_FEATURES = 5


def _round_up(n, m):
    return ((n + m - 1) // m) * m


def toy_mp_kernel(x_ref, w1t_ref, b1_ref, w2t_ref, b2_ref, o_ref):
    # x_ref  : (tb, IN)   f32  -- native batch-major tile (contiguous in HBM)
    # w1t_ref: (IN, HID)  f32  -- net1 weight, pre-transposed (tiny, resident)
    # b1_ref : (1, HID)   f32
    # w2t_ref: (HID, OUT) f32  -- net2 weight, pre-transposed (tiny, resident)
    # b2_ref : (1, OUT)   f32
    # o_ref  : (tb, OUT)  f32  -- torch-native output layout
    h = jnp.dot(x_ref[...], w1t_ref[...], preferred_element_type=jnp.float32)
    h = jnp.maximum(h + b1_ref[...], 0.0)          # bias + ReLU on the VPU
    y = jnp.dot(h, w2t_ref[...], preferred_element_type=jnp.float32)
    o_ref[...] = y + b2_ref[...]


def toy_mp_forward(x, w1, b1, w2, b2, *, batch_tile=8192):
    """x: (B, 10) f32; w1: (10, 10) torch (out,in); b1: (10,); w2: (5, 10); b2: (5,).

    Returns (B, 5) f32, matching ToyMpModel.forward (no wrapper relayout ops).
    """
    B = x.shape[0]

    # Tiny one-off weight prep only (a few hundred bytes; x/y are untouched).
    w1t = jnp.transpose(w1).astype(jnp.float32)             # (IN, HID)
    w2t = jnp.transpose(w2).astype(jnp.float32)             # (HID, OUT)
    b1r = b1.reshape(1, HIDDEN).astype(jnp.float32)          # (1, HID)
    b2r = b2.reshape(1, OUT_FEATURES).astype(jnp.float32)    # (1, OUT)

    # Batch tile: multiple of 8 (sublane rule); a partial last block is handled
    # (masked) by Pallas.  Keep >= 2 grid steps for moderate/large B so the
    # ("parallel",) axis can split across both v7x TensorCores.
    tb = min(batch_tile, _round_up(B, 8))
    if tb >= B and B >= 256:
        tb = _round_up(pl.cdiv(B, 2), 8)
    grid = (pl.cdiv(B, tb),)

    def resident(arr):
        nd = arr.ndim
        # Same (only) block on every grid step -> stays resident in VMEM.
        return pl.BlockSpec(arr.shape, lambda i: (0,) * nd)

    cost = pl.CostEstimate(
        flops=2 * B * (IN_FEATURES * HIDDEN + HIDDEN * OUT_FEATURES),
        transcendentals=0,
        bytes_accessed=B * (IN_FEATURES + OUT_FEATURES) * 4
        + 4 * (IN_FEATURES * HIDDEN + HIDDEN + HIDDEN * OUT_FEATURES + OUT_FEATURES),
    )

    out = pl.pallas_call(
        toy_mp_kernel,
        out_shape=jax.ShapeDtypeStruct((B, OUT_FEATURES), jnp.float32),
        grid=grid,
        in_specs=[
            pl.BlockSpec((tb, IN_FEATURES), lambda i: (i, 0)),   # stream x tiles
            resident(w1t),
            resident(b1r),
            resident(w2t),
            resident(b2r),
        ],
        out_specs=pl.BlockSpec((tb, OUT_FEATURES), lambda i: (i, 0)),
        compiler_params=pltpu.CompilerParams(
            dimension_semantics=("parallel",),   # v7x: shard batch over 2 TCs
            vmem_limit_bytes=32 * 1024 * 1024,   # tiles lane-pad 10/5 -> 128
        ),
        cost_estimate=cost,
    )(x.astype(jnp.float32), w1t, b1r, w2t, b2r)

    return out


def init_params(key):
    """Deterministic init matching nn.Linear (torch (out, in) layout)."""
    k1, k2, k3, k4 = jax.random.split(key, 4)
    bound1 = 1.0 / jnp.sqrt(jnp.float32(IN_FEATURES))
    w1 = jax.random.uniform(k1, (HIDDEN, IN_FEATURES), jnp.float32, -bound1, bound1)
    b1 = jax.random.uniform(k2, (HIDDEN,), jnp.float32, -bound1, bound1)
    bound2 = 1.0 / jnp.sqrt(jnp.float32(HIDDEN))
    w2 = jax.random.uniform(k3, (OUT_FEATURES, HIDDEN), jnp.float32, -bound2, bound2)
    b2 = jax.random.uniform(k4, (OUT_FEATURES,), jnp.float32, -bound2, bound2)
    return w1, b1, w2, b2


if __name__ == "__main__":
    key = jax.random.PRNGKey(0)
    k_x, k_p = jax.random.split(key)

    batch = 8
    x = jax.random.normal(k_x, (batch, IN_FEATURES), dtype=jnp.float32)
    w1, b1, w2, b2 = init_params(k_p)

    out = jax.block_until_ready(toy_mp_forward(x, w1, b1, w2, b2))

    # Pure-f32 JAX reference (PyTorch semantics).  The in-kernel MXU matmul at
    # default precision may use bf16 passes internally, hence loose tolerance.
    ref = jnp.maximum(x @ w1.T + b1, 0.0) @ w2.T + b2

    assert out.shape == (batch, OUT_FEATURES), out.shape
    assert jnp.allclose(out, ref, atol=2e-2, rtol=2e-2), "mismatch vs reference"

    print("KERNEL_OK")
</pallas_src>

<mosaic_0001>
module attributes {stable_mosaic.version = 11 : i64} {
  func.func @toy_mp_kernel(%arg0: i32, %arg1: memref<8x10xf32, #tpu.memory_space<vmem>>, %arg2: memref<10x10xf32, #tpu.memory_space<vmem>>, %arg3: memref<1x10xf32, #tpu.memory_space<vmem>>, %arg4: memref<10x5xf32, #tpu.memory_space<vmem>>, %arg5: memref<1x5xf32, #tpu.memory_space<vmem>>, %arg6: memref<8x5xf32, #tpu.memory_space<vmem>>) attributes {dimension_semantics = [#tpu.dimension_semantics<parallel>], iteration_bounds = array<i64: 1>, scalar_prefetch = 0 : i64, scratch_operands = 0 : i64, tpu.core_type = #tpu.core_type<tc>, window_params = [{transform_indices = @transform_0, window_bounds = array<i64: 8, 10>}, {pipeline_mode = #tpu.pipeline_mode<synchronous>, transform_indices = @transform_1, window_bounds = array<i64: 10, 10>}, {pipeline_mode = #tpu.pipeline_mode<synchronous>, transform_indices = @transform_2, window_bounds = array<i64: 1, 10>}, {pipeline_mode = #tpu.pipeline_mode<synchronous>, transform_indices = @transform_3, window_bounds = array<i64: 10, 5>}, {pipeline_mode = #tpu.pipeline_mode<synchronous>, transform_indices = @transform_4, window_bounds = array<i64: 1, 5>}, {transform_indices = @transform_5, window_bounds = array<i64: 8, 5>}]} {
    %c0 = arith.constant 0 : index
    %c0_0 = arith.constant 0 : index
    %0 = vector.load %arg1[%c0, %c0_0] : memref<8x10xf32, #tpu.memory_space<vmem>>, vector<8x10xf32>
    %c0_1 = arith.constant 0 : index
    %c0_2 = arith.constant 0 : index
    %1 = vector.load %arg2[%c0_1, %c0_2] : memref<10x10xf32, #tpu.memory_space<vmem>>, vector<10x10xf32>
    %cst = arith.constant dense<0.000000e+00> : vector<8x10xf32>
    %2 = tpu.matmul %0, %1, %cst {dimension_numbers = #tpu.dot_dimension_numbers<[1], [0], [0], [1], [0, 0, 1, 1], [], []>} : vector<8x10xf32>, vector<10x10xf32>, vector<8x10xf32> -> vector<8x10xf32>
    %c0_3 = arith.constant 0 : index
    %c0_4 = arith.constant 0 : index
    %3 = vector.load %arg3[%c0_3, %c0_4] : memref<1x10xf32, #tpu.memory_space<vmem>>, vector<1x10xf32>
    %4 = vector.broadcast %3 : vector<1x10xf32> to vector<8x10xf32>
    %5 = arith.addf %2, %4 : vector<8x10xf32>
    %cst_5 = arith.constant 0.000000e+00 : f32
    %6 = vector.broadcast %cst_5 : f32 to vector<8x10xf32>
    %7 = arith.maximumf %5, %6 : vector<8x10xf32>
    %c0_6 = arith.constant 0 : index
    %c0_7 = arith.constant 0 : index
    %8 = vector.load %arg4[%c0_6, %c0_7] : memref<10x5xf32, #tpu.memory_space<vmem>>, vector<10x5xf32>
    %cst_8 = arith.constant dense<0.000000e+00> : vector<8x5xf32>
    %9 = tpu.matmul %7, %8, %cst_8 {dimension_numbers = #tpu.dot_dimension_numbers<[1], [0], [0], [1], [0, 0, 1, 1], [], []>} : vector<8x10xf32>, vector<10x5xf32>, vector<8x5xf32> -> vector<8x5xf32>
    %c0_9 = arith.constant 0 : index
    %c0_10 = arith.constant 0 : index
    %10 = vector.load %arg5[%c0_9, %c0_10] : memref<1x5xf32, #tpu.memory_space<vmem>>, vector<1x5xf32>
    %11 = vector.broadcast %10 : vector<1x5xf32> to vector<8x5xf32>
    %12 = arith.addf %9, %11 : vector<8x5xf32>
    %c0_11 = arith.constant 0 : index
    %c0_12 = arith.constant 0 : index
    %13 = vector.load %arg6[%c0_11, %c0_12] : memref<8x5xf32, #tpu.memory_space<vmem>>, vector<8x5xf32>
    tpu.vector_store %arg6[%c0_11, %c0_12], %12 {strides = array<i32>} : memref<8x5xf32, #tpu.memory_space<vmem>>, vector<8x5xf32>,
    return
  }
  func.func @transform_0(%arg0: i32) -> (i32, i32) {
    %c0_i32 = arith.constant 0 : i32
    %c0_i32_0 = arith.constant 0 : i32
    return %arg0, %c0_i32 : i32, i32
  }
  func.func @transform_1(%arg0: i32) -> (i32, i32) {
    %c0_i32 = arith.constant 0 : i32
    %c0_i32_0 = arith.constant 0 : i32
    %c0_i32_1 = arith.constant 0 : i32
    return %c0_i32, %c0_i32_0 : i32, i32
  }
  func.func @transform_2(%arg0: i32) -> (i32, i32) {
    %c0_i32 = arith.constant 0 : i32
    %c0_i32_0 = arith.constant 0 : i32
    %c0_i32_1 = arith.constant 0 : i32
    return %c0_i32, %c0_i32_0 : i32, i32
  }
  func.func @transform_3(%arg0: i32) -> (i32, i32) {
    %c0_i32 = arith.constant 0 : i32
    %c0_i32_0 = arith.constant 0 : i32
    %c0_i32_1 = arith.constant 0 : i32
    return %c0_i32, %c0_i32_0 : i32, i32
  }
  func.func @transform_4(%arg0: i32) -> (i32, i32) {
    %c0_i32 = arith.constant 0 : i32
    %c0_i32_0 = arith.constant 0 : i32
    %c0_i32_1 = arith.constant 0 : i32
    return %c0_i32, %c0_i32_0 : i32, i32
  }
  func.func @transform_5(%arg0: i32) -> (i32, i32) {
    %c0_i32 = arith.constant 0 : i32
    %c0_i32_0 = arith.constant 0 : i32
    return %arg0, %c0_i32 : i32, i32
  }
}

</mosaic_0001>

<llo_original>
// kernel: tpu_custom_call.1
$region0: #{tpu_custom_call.1}
  #allocation0 [shape = 'u32[]', space=smem, size = 0x4, offset = 0x4, fixed_abs, tag = 'smem constant byte address 0x4 - core index']
  #allocation1 [shape = 'u32[72,128]{1,0:T(1,128)}', space=vmem, size = 0x9000, scoped, tag = 'internal scratch']
  %s0 = inlined_call_operand.vmem [shape: f32[8,10], index: 0, kind: input, shape index: {}]
  %s1 = inlined_call_operand.vmem [shape: f32[10,10], index: 1, kind: input, shape index: {}]
  %s2 = inlined_call_operand.vmem [shape: f32[1,10], index: 2, kind: input, shape index: {}]
  %s3 = inlined_call_operand.vmem [shape: f32[10,5], index: 3, kind: input, shape index: {}]
  %s4 = inlined_call_operand.vmem [shape: f32[1,5], index: 4, kind: input, shape index: {}]
  %s5 = inlined_call_operand.hbm [shape: f32[8,5], index: 5, kind: output, shape index: {}]
  %s6 = sld [smem:[#allocation0]]
  $region30: #{tpu_custom_call.1} parent=0
    _
  %s8 = ssub.s32 1, %s6
  %s9 = scalar_select 0, %s8, %s6
  $region1: #{tpu_custom_call.1} parent=0
    #allocation2 [shape = 'u8[4096]{0}', space=vmem, size = 0x1000, scoped, tag = 'output window, operand 0, single buffered']
    #allocation3 [shape = 's32[1]{0}', space=sflag, size = 0x4, scoped, tag = 'scoped memory for tpu_custom_call.1']
    %10 = vsyncpa [#allocation3], 0
    // Predicated region
    $region2: #{tpu_custom_call.1} parent=1 // pred_check
      _
    $region3: #{tpu_custom_call.1} parent=1 // pred_check_branch
      %12 = sbr.rel (0) target = $region5
    $region4: #{tpu_custom_call.1} parent=1 // pred_region
      _
    $region5: #{tpu_custom_call.1} parent=1 // pred_fallthru
      _
    // Predicated region
    $region6: #{tpu_custom_call.1} parent=1 // pred_check
      _
    $region7: #{tpu_custom_call.1} parent=1 // pred_check_branch
      %14 = sbr.rel (0) target = $region9
    $region8: #{tpu_custom_call.1} parent=1 // pred_region
      _
    $region9: #{tpu_custom_call.1} parent=1 // pred_fallthru
      _
    // Predicated region
    $region10: #{tpu_custom_call.1} parent=1 // pred_check
      _
    $region11: #{tpu_custom_call.1} parent=1 // pred_check_branch
      %16 = sbr.rel (0) target = $region13
    $region12: #{tpu_custom_call.1} parent=1 // pred_region
      _
    $region13: #{tpu_custom_call.1} parent=1 // pred_fallthru
      _
    // Predicated region
    $region14: #{tpu_custom_call.1} parent=1 // pred_check
      _
    $region15: #{tpu_custom_call.1} parent=1 // pred_check_branch
      %18 = sbr.rel (0) target = $region17
    $region16: #{tpu_custom_call.1} parent=1 // pred_region
      _
    $region17: #{tpu_custom_call.1} parent=1 // pred_fallthru
      _
    // Predicated region
    $region18: #{tpu_custom_call.1} parent=1 // pred_check
      _
    $region19: #{tpu_custom_call.1} parent=1 // pred_check_branch
      %20 = sbr.rel (0) target = $region21
    $region20: #{tpu_custom_call.1} parent=1 // pred_region
      _
    $region21: #{tpu_custom_call.1} parent=1 // pred_fallthru
      _
    %v21 = vld [vmem:[%s0] sm:$0xff]
    %v22 = vld [vmem:[%s1] sm:$0xff]
    %v23 = vld [vmem:[%s1 + $0x8] sm:$0x3]
    %v24 = vld [vmem:[%s2] sm:$0x1]
    %v26 = vperm.slane %v24, 0
    %vm28 = vcmask 80896
    %v30 = vsel %vm28, %v21, 0
    %vm32 = vcmask 1041408
    %v34 = vsel %vm32, %v23, 0
    %36 = vmatpush.msra.mxu0 0.0
    %37 = vmatpush.msra.mxu0 0.0
    %38 = vmatpush.msra.mxu0 0.0
    %39 = vmatpush.msra.mxu0 0.0
    %40 = vmatpush.msra.mxu0 0.0
    %41 = vmatpush.msra.mxu0 0.0
    %42 = vmatpush.msra.mxu0 0.0
    %43 = vmatpush.msra.mxu0 0.0
    %44 = vmatpush.msra.mxu0 0.0
    %45 = vmatpush.msra.mxu0 0.0
    %46 = vmatpush.msra.mxu0 0.0
    %47 = vmatpush.msra.mxu0 0.0
    %48 = vmatpush.msra.mxu0 0.0
    %49 = vmatpush.msra.mxu0 0.0
    %50 = vmatpush.msra.mxu0 %v34
    %51 = vmatpush.msra.mxu0 %v22
    %52 = vmatmul.f32.gmra.mxu0 %v30
    %v53 = vpop.f32.mrf.mxu0
    %v54 = vadd.f32 %v26, %v53
    %55 = vdwg.mxu0
    %v56 = vmax.f32 %v54, 0.0
    %v57 = vld [vmem:[%s3] sm:$0xff]
    %v58 = vld [vmem:[%s3 + $0x8] sm:$0x3]
    %v59 = vld [vmem:[%s4] sm:$0x1]
    %v61 = vperm.slane %v59, 0
    %v64 = vsel %vm28, %v56, 0
    %v67 = vsel %vm32, %v58, 0
    %69 = vmatpush.msra.mxu0 0.0
    %70 = vmatpush.msra.mxu0 0.0
    %71 = vmatpush.msra.mxu0 0.0
    %72 = vmatpush.msra.mxu0 0.0
    %73 = vmatpush.msra.mxu0 0.0
    %74 = vmatpush.msra.mxu0 0.0
    %75 = vmatpush.msra.mxu0 0.0
    %76 = vmatpush.msra.mxu0 0.0
    %77 = vmatpush.msra.mxu0 0.0
    %78 = vmatpush.msra.mxu0 0.0
    %79 = vmatpush.msra.mxu0 0.0
    %80 = vmatpush.msra.mxu0 0.0
    %81 = vmatpush.msra.mxu0 0.0
    %82 = vmatpush.msra.mxu0 0.0
    %83 = vmatpush.msra.mxu0 %v67
    %84 = vmatpush.msra.mxu0 %v57
    %85 = vmatmul.f32.gmra.mxu0 %v64
    %v86 = vpop.f32.mrf.mxu0
    %v87 = vadd.f32 %v61, %v86
    %88 = vdwg.mxu0
    %vm89 = vcmask 39936
    %90 = vst.msk [vmem:[#allocation2] sm:$0xff] %vm89, %v87
    // Predicated region
    $region22: #{tpu_custom_call.1} parent=1 // pred_check
      _
    $region23: #{tpu_custom_call.1} parent=1 // pred_check_branch
      %92 = sbr.rel (0) target = $region25
    $region24: #{tpu_custom_call.1} parent=1 // pred_region
      %94 = vsyncadd [#allocation3], 0
      %s96 = sshll.u32 [#allocation2], 4
      %s97 = int_to_ptr.vmem [resolvable:$true] %s96
      %s98 = sshll.u32 %s5, 4
      %s99 = int_to_ptr.hbm [resolvable:$true] %s98
      %101 = dma.vmem_to_hbm [thread:$0]  %s97, 128, %s99, [#allocation3]
    $region25: #{tpu_custom_call.1} parent=1 // pred_fallthru
      _
    // Predicated region
    $region26: #{tpu_custom_call.1} parent=1 // pred_check
      _
    $region27: #{tpu_custom_call.1} parent=1 // pred_check_branch
      %103 = sbr.rel (0) target = $region29
    $region28: #{tpu_custom_call.1} parent=1 // pred_region
      %105 = dma.done [#allocation3], 128
    $region29: #{tpu_custom_call.1} parent=1 // pred_fallthru
      _
    %106 = vsyncpa [#allocation3], 1

</llo_original>
